<compile_context>
chip_gen: v6e
topology: v6e:2x2x1
jax: 0.10.0
libtpu: 0.0.40
codegen_flags: <defaults>
</compile_context>

<pallas_src>
import functools
from typing import NamedTuple

import jax
import jax.numpy as jnp
from jax import lax
from jax.experimental import pallas as pl
from jax.experimental.pallas import tpu as pltpu

LANE = 128    # only the FINAL feature dim is padded to this (lane-dense store)
SUBLANE = 8   # f32 sublane width; all other padded dims round to this


def _round_up(n: int, m: int) -> int:
    return ((n + m - 1) // m) * m


def _pad_axis(a, axis: int, target: int):
    pad = target - a.shape[axis]
    if pad <= 0:
        return a
    widths = [(0, 0)] * a.ndim
    widths[axis] = (0, pad)
    return jnp.pad(a, widths)


class NetDims(NamedTuple):
    din: int
    h1: int
    h2: int
    dout: int
    din_p: int
    h1_p: int
    h2_p: int
    dout_p: int


def prepare_params(stacked_params, *, weight_dtype=jnp.float32):
    """Pad (and optionally cast) stacked parameters ONCE, outside the per-call path.

    stacked_params: (w1, b1, w2, b2, w3, b3), each with a leading agent axis A.
      w*: [A, in_features, out_features], b*: [A, 1, out_features]
    Only the final output dim is lane-padded to 128; all other feature dims are
    rounded to the 8-row sublane.  Padded weight/bias entries are zero, so the
    padded activation lanes stay exactly zero (actor norm unaffected).
    Biases are kept in float32 even when weight_dtype is bfloat16.
    """
    w1, b1, w2, b2, w3, b3 = stacked_params
    din, h1d = int(w1.shape[1]), int(w1.shape[2])
    h2d, dout = int(w2.shape[2]), int(w3.shape[2])

    din_p = _round_up(din, SUBLANE)
    h1_p = _round_up(h1d, SUBLANE)
    h2_p = _round_up(h2d, SUBLANE)
    dout_p = _round_up(dout, LANE)

    w1p = _pad_axis(_pad_axis(w1, 1, din_p), 2, h1_p).astype(weight_dtype)
    b1p = _pad_axis(b1, 2, h1_p).astype(jnp.float32)
    w2p = _pad_axis(_pad_axis(w2, 1, h1_p), 2, h2_p).astype(weight_dtype)
    b2p = _pad_axis(b2, 2, h2_p).astype(jnp.float32)
    w3p = _pad_axis(_pad_axis(w3, 1, h2_p), 2, dout_p).astype(weight_dtype)
    b3p = _pad_axis(b3, 2, dout_p).astype(jnp.float32)

    dims = NetDims(din, h1d, h2d, dout, din_p, h1_p, h2_p, dout_p)
    return (w1p, b1p, w2p, b2p, w3p, b3p), dims


def _mlp3(x, w1, b1, w2, b2, w3, b3):
    """fc1->relu->fc2->relu->fc3 with f32 accumulation (weights may be bf16)."""
    dt = w1.dtype
    h1 = jnp.maximum(
        jnp.dot(x.astype(dt), w1, preferred_element_type=jnp.float32) + b1, 0.0)
    h2 = jnp.maximum(
        jnp.dot(h1.astype(dt), w2, preferred_element_type=jnp.float32) + b2, 0.0)
    return jnp.dot(h2.astype(dt), w3, preferred_element_type=jnp.float32) + b3


def _actor_epilogue(h3, batch: int):
    """10 * tanh(||h3||) * h3 / ||h3||  (torch.norm == Frobenius over real rows)."""
    if batch < h3.shape[0]:
        # Zero-padded batch rows would otherwise carry bias-propagated values
        # into the global norm; mask them (padded feature lanes are already 0).
        rows = lax.broadcasted_iota(jnp.int32, h3.shape, 0)
        h3 = jnp.where(rows < batch, h3, 0.0)
    sq = jnp.sum(h3 * h3)
    safe_sq = jnp.where(sq > 0.0, sq, 1.0)
    inv_norm = lax.rsqrt(safe_sq)        # EUP slot; no VPU divide
    norm = sq * inv_norm                 # sqrt(sq) without a second EUP op
    scale = jnp.where(sq > 0.0, 10.0 * jnp.tanh(norm) * inv_norm, 10.0)
    return scale * h3


def _fused_kernel(x_ref, w1_ref, b1_ref, w2_ref, b2_ref, w3_ref, b3_ref,
                  out_ref, *, actor: bool, num_agents: int, batch: int):
    # Single grid step: all A agents' (tiny) operands are VMEM-resident and the
    # agent loop is a static unroll, so there is no per-agent pipeline-step
    # overhead (~0.35 us each) — the win on single-TensorCore v5e / v6e.
    for a in range(num_agents):
        h3 = _mlp3(x_ref[a], w1_ref[a], b1_ref[a], w2_ref[a], b2_ref[a],
                   w3_ref[a], b3_ref[a])
        if actor:
            h3 = _actor_epilogue(h3, batch)
        out_ref[a] = h3.astype(out_ref.dtype)


def _cost(A, b_p, dims, padded_params, x_bytes, actor):
    flops = 2 * A * b_p * (dims.din_p * dims.h1_p + dims.h1_p * dims.h2_p
                           + dims.h2_p * dims.dout_p)
    bytes_accessed = int(x_bytes
                         + sum(int(p.size) * p.dtype.itemsize for p in padded_params)
                         + A * b_p * dims.dout_p * 4)
    return pl.CostEstimate(flops=int(flops),
                           transcendentals=int(A if actor else 0),
                           bytes_accessed=bytes_accessed)


def multi_network_forward(x, padded_params, dims, *, actor: bool):
    """Fused forward over A stacked networks in ONE pallas_call / ONE grid step.

    x: [A, B, input_dim] (unpadded); padded_params/dims from prepare_params().
    Returns [A, B, output_dim] float32.
    Intended for the small-batch (inference/actor) path; on v7x the batch-tiled
    critic path below is what feeds both TensorCores.
    """
    w1p, b1p, w2p, b2p, w3p, b3p = padded_params
    A, B, din = x.shape
    assert din == dims.din
    b_p = _round_up(B, SUBLANE)

    # Only the activations are padded per call (params were padded once).
    xp = _pad_axis(_pad_axis(x, 2, dims.din_p), 1, b_p).astype(w1p.dtype)

    kernel = functools.partial(_fused_kernel, actor=actor, num_agents=A, batch=B)
    out_p = pl.pallas_call(
        kernel,
        out_shape=jax.ShapeDtypeStruct((A, b_p, dims.dout_p), jnp.float32),
        cost_estimate=_cost(A, b_p, dims, padded_params,
                            int(xp.size) * xp.dtype.itemsize, actor),
    )(xp, w1p, b1p, w2p, b2p, w3p, b3p)
    return out_p[:, :B, :dims.dout]


def _tiled_kernel(x_ref, w1_ref, b1_ref, w2_ref, b2_ref, w3_ref, b3_ref, out_ref):
    out_ref[...] = _mlp3(x_ref[...], w1_ref[...], b1_ref[...], w2_ref[...],
                         b2_ref[...], w3_ref[...], b3_ref[...]).astype(out_ref.dtype)


def multi_network_forward_batched(x, padded_params, dims, *, block_b: int = 128):
    """Batch-tiled CRITIC forward for replay-size batches.

    grid = (A, B/block_b); weights' index_map is pinned to (a, 0, 0) so each
    agent's weights stay VMEM-resident across its batch tiles, while x/out
    tiles are pipelined.  Both grid axes are independent ("parallel") so v7x's
    two TensorCores can split the (even) batch-tile axis.  Use bf16
    padded_params (prepare_params(weight_dtype=jnp.bfloat16)) on v6e/v7x for
    ~2x matmul throughput and half the DMA bytes; accumulation stays f32.
    """
    # TODO(synk): batch-tiled ACTOR variant needs a two-pass global norm
    # (per-tile partial sums, then rescale); the actor uses the fused path.
    w1p, b1p, w2p, b2p, w3p, b3p = padded_params
    A, B, din = x.shape
    assert din == dims.din

    block_b = max(SUBLANE,
                  _round_up(min(block_b, _round_up(B, SUBLANE)), SUBLANE))
    b_p = _round_up(B, block_b)
    nbt = b_p // block_b

    xp = _pad_axis(_pad_axis(x, 2, dims.din_p), 1, b_p).astype(w1p.dtype)

    weight_map = lambda a, t: (a, 0, 0)   # resident across the batch-tile axis
    act_map = lambda a, t: (a, t, 0)

    out_p = pl.pallas_call(
        _tiled_kernel,
        out_shape=jax.ShapeDtypeStruct((A, b_p, dims.dout_p), jnp.float32),
        grid=(A, nbt),
        in_specs=[
            pl.BlockSpec((None, block_b, dims.din_p), act_map),      # x tile
            pl.BlockSpec((None, dims.din_p, dims.h1_p), weight_map),  # w1
            pl.BlockSpec((None, 1, dims.h1_p), weight_map),           # b1
            pl.BlockSpec((None, dims.h1_p, dims.h2_p), weight_map),   # w2
            pl.BlockSpec((None, 1, dims.h2_p), weight_map),           # b2
            pl.BlockSpec((None, dims.h2_p, dims.dout_p), weight_map), # w3
            pl.BlockSpec((None, 1, dims.dout_p), weight_map),         # b3
        ],
        out_specs=pl.BlockSpec((None, block_b, dims.dout_p), act_map),
        compiler_params=pltpu.CompilerParams(
            dimension_semantics=("parallel", "parallel"),
        ),
        cost_estimate=_cost(A, b_p, dims, padded_params,
                            int(xp.size) * xp.dtype.itemsize, False),
    )(xp, w1p, b1p, w2p, b2p, w3p, b3p)
    return out_p[:, :B, :dims.dout]


def network_forward(x, params, *, actor: bool):
    """One-shot single-network forward (A=1).  For repeated calls, call
    prepare_params() once and use multi_network_forward directly so the weight
    padding is hoisted out of the per-call path."""
    stacked = tuple(p[None] for p in params)
    padded, dims = prepare_params(stacked)
    return multi_network_forward(x[None], padded, dims, actor=actor)[0]


def init_params(key, input_dim, hidden_in_dim, hidden_out_dim, output_dim):
    """Deterministic init mirroring the module's layer shapes.
    Weights are stored as [in_features, out_features]."""
    ks = jax.random.split(key, 6)

    def uni(k, shape, lim):
        return jax.random.uniform(k, shape, jnp.float32, minval=-lim, maxval=lim)

    w1 = uni(ks[0], (input_dim, hidden_in_dim), 1.0 / jnp.sqrt(float(hidden_in_dim)))
    b1 = uni(ks[1], (1, hidden_in_dim), 1.0 / jnp.sqrt(float(input_dim)))
    w2 = uni(ks[2], (hidden_in_dim, hidden_out_dim), 1.0 / jnp.sqrt(float(hidden_out_dim)))
    b2 = uni(ks[3], (1, hidden_out_dim), 1.0 / jnp.sqrt(float(hidden_in_dim)))
    w3 = uni(ks[4], (hidden_out_dim, output_dim), 1e-3)
    b3 = uni(ks[5], (1, output_dim), 1.0 / jnp.sqrt(float(hidden_out_dim)))
    return (w1, b1, w2, b2, w3, b3)


def reference_forward(x, params, *, actor: bool):
    """Plain-JAX reference for correctness checking."""
    w1, b1, w2, b2, w3, b3 = params
    h1 = jnp.maximum(x @ w1 + b1, 0.0)
    h2 = jnp.maximum(h1 @ w2 + b2, 0.0)
    h3 = h2 @ w3 + b3
    if actor:
        norm = jnp.sqrt(jnp.sum(h3 * h3))
        return jnp.where(norm > 0.0,
                         10.0 * jnp.tanh(norm) * h3 / jnp.where(norm > 0.0, norm, 1.0),
                         10.0 * h3)
    return h3


if __name__ == "__main__":
    key = jax.random.PRNGKey(0)
    k_x, k_p, k_multi, k_big = jax.random.split(key, 4)

    # Small shapes consistent with the MADDPG usage of this module.
    batch, input_dim, hidden_in_dim, hidden_out_dim, output_dim = 2, 16, 32, 32, 4
    n_agents = 3

    # --- single network (A=1): padding hoisted via prepare_params ---
    x = jax.random.normal(k_x, (batch, input_dim), dtype=jnp.float32)
    params = init_params(k_p, input_dim, hidden_in_dim, hidden_out_dim, output_dim)
    padded1, dims1 = prepare_params(tuple(p[None] for p in params))

    out_actor = multi_network_forward(x[None], padded1, dims1, actor=True)[0]
    out_critic = multi_network_forward(x[None], padded1, dims1, actor=False)[0]
    jax.block_until_ready((out_actor, out_critic))

    ref_actor = reference_forward(x, params, actor=True)
    ref_critic = reference_forward(x, params, actor=False)
    assert out_actor.shape == (batch, output_dim)
    assert out_critic.shape == (batch, output_dim)
    assert jnp.allclose(out_actor, ref_actor, atol=1e-5, rtol=1e-5)
    assert jnp.allclose(out_critic, ref_critic, atol=1e-5, rtol=1e-5)

    # --- fused multi-agent path: all agents' forwards in ONE grid step ---
    agent_keys = jax.random.split(k_multi, n_agents + 1)
    x_multi = jax.random.normal(agent_keys[0], (n_agents, batch, input_dim),
                                dtype=jnp.float32)
    per_agent_params = [
        init_params(agent_keys[i + 1], input_dim, hidden_in_dim,
                    hidden_out_dim, output_dim)
        for i in range(n_agents)
    ]
    stackedA = tuple(
        jnp.stack([per_agent_params[a][j] for a in range(n_agents)], axis=0)
        for j in range(6))
    paddedA, dimsA = prepare_params(stackedA)

    out_ma = multi_network_forward(x_multi, paddedA, dimsA, actor=True)
    out_mc = multi_network_forward(x_multi, paddedA, dimsA, actor=False)
    jax.block_until_ready((out_ma, out_mc))

    ref_ma = jnp.stack([reference_forward(x_multi[a], per_agent_params[a], actor=True)
                        for a in range(n_agents)])
    ref_mc = jnp.stack([reference_forward(x_multi[a], per_agent_params[a], actor=False)
                        for a in range(n_agents)])
    assert out_ma.shape == (n_agents, batch, output_dim)
    assert out_mc.shape == (n_agents, batch, output_dim)
    assert jnp.allclose(out_ma, ref_ma, atol=1e-5, rtol=1e-5)
    assert jnp.allclose(out_mc, ref_mc, atol=1e-5, rtol=1e-5)

    # --- batch-tiled critic path (replay batch), weights VMEM-resident ---
    big_b = 256
    x_big = jax.random.normal(k_big, (n_agents, big_b, input_dim), dtype=jnp.float32)
    out_big = multi_network_forward_batched(x_big, paddedA, dimsA, block_b=128)
    jax.block_until_ready(out_big)
    ref_big = jnp.stack([reference_forward(x_big[a], per_agent_params[a], actor=False)
                         for a in range(n_agents)])
    assert out_big.shape == (n_agents, big_b, output_dim)
    assert jnp.allclose(out_big, ref_big, atol=1e-4, rtol=1e-4)

    # --- bf16 critic path (native bf16 MXU on v6e/v7x, f32 accumulation) ---
    padded_bf16, dims_bf16 = prepare_params(stackedA, weight_dtype=jnp.bfloat16)
    out_bf16 = multi_network_forward_batched(x_big, padded_bf16, dims_bf16, block_b=128)
    jax.block_until_ready(out_bf16)
    assert out_bf16.shape == (n_agents, big_b, output_dim)
    assert jnp.allclose(out_bf16, ref_big, atol=1e-2, rtol=1e-2)

    print("KERNEL_OK")
</pallas_src>

<mosaic_0001>
module attributes {stable_mosaic.version = 11 : i64} {
  func.func @_fused_kernel(%arg0: memref<1x8x16xf32, #tpu.memory_space<vmem>>, %arg1: memref<1x16x32xf32, #tpu.memory_space<vmem>>, %arg2: memref<1x1x32xf32, #tpu.memory_space<vmem>>, %arg3: memref<1x32x32xf32, #tpu.memory_space<vmem>>, %arg4: memref<1x1x32xf32, #tpu.memory_space<vmem>>, %arg5: memref<1x32x128xf32, #tpu.memory_space<vmem>>, %arg6: memref<1x1x128xf32, #tpu.memory_space<vmem>>, %arg7: memref<1x8x128xf32, #tpu.memory_space<vmem>>) attributes {dimension_semantics = [], scalar_prefetch = 0 : i64, scratch_operands = 0 : i64, tpu.core_type = #tpu.core_type<tc>} {
    %c0 = arith.constant 0 : index
    %c0_0 = arith.constant 0 : index
    %c0_1 = arith.constant 0 : index
    %0 = vector.load %arg0[%c0, %c0_0, %c0_1] : memref<1x8x16xf32, #tpu.memory_space<vmem>>, vector<1x8x16xf32>
    %1 = vector.shape_cast %0 : vector<1x8x16xf32> to vector<8x16xf32>
    %c0_2 = arith.constant 0 : index
    %c0_3 = arith.constant 0 : index
    %c0_4 = arith.constant 0 : index
    %2 = vector.load %arg1[%c0_2, %c0_3, %c0_4] : memref<1x16x32xf32, #tpu.memory_space<vmem>>, vector<1x16x32xf32>
    %3 = vector.shape_cast %2 : vector<1x16x32xf32> to vector<16x32xf32>
    %c0_5 = arith.constant 0 : index
    %c0_6 = arith.constant 0 : index
    %c0_7 = arith.constant 0 : index
    %4 = vector.load %arg2[%c0_5, %c0_6, %c0_7] : memref<1x1x32xf32, #tpu.memory_space<vmem>>, vector<1x1x32xf32>
    %5 = vector.shape_cast %4 : vector<1x1x32xf32> to vector<1x32xf32>
    %c0_8 = arith.constant 0 : index
    %c0_9 = arith.constant 0 : index
    %c0_10 = arith.constant 0 : index
    %6 = vector.load %arg3[%c0_8, %c0_9, %c0_10] : memref<1x32x32xf32, #tpu.memory_space<vmem>>, vector<1x32x32xf32>
    %7 = vector.shape_cast %6 : vector<1x32x32xf32> to vector<32x32xf32>
    %c0_11 = arith.constant 0 : index
    %c0_12 = arith.constant 0 : index
    %c0_13 = arith.constant 0 : index
    %8 = vector.load %arg4[%c0_11, %c0_12, %c0_13] : memref<1x1x32xf32, #tpu.memory_space<vmem>>, vector<1x1x32xf32>
    %9 = vector.shape_cast %8 : vector<1x1x32xf32> to vector<1x32xf32>
    %c0_14 = arith.constant 0 : index
    %c0_15 = arith.constant 0 : index
    %c0_16 = arith.constant 0 : index
    %10 = vector.load %arg5[%c0_14, %c0_15, %c0_16] : memref<1x32x128xf32, #tpu.memory_space<vmem>>, vector<1x32x128xf32>
    %11 = vector.shape_cast %10 : vector<1x32x128xf32> to vector<32x128xf32>
    %c0_17 = arith.constant 0 : index
    %c0_18 = arith.constant 0 : index
    %c0_19 = arith.constant 0 : index
    %12 = vector.load %arg6[%c0_17, %c0_18, %c0_19] : memref<1x1x128xf32, #tpu.memory_space<vmem>>, vector<1x1x128xf32>
    %13 = vector.shape_cast %12 : vector<1x1x128xf32> to vector<1x128xf32>
    %cst = arith.constant dense<0.000000e+00> : vector<8x32xf32>
    %14 = tpu.matmul %1, %3, %cst {dimension_numbers = #tpu.dot_dimension_numbers<[1], [0], [0], [1], [0, 0, 1, 1], [], []>} : vector<8x16xf32>, vector<16x32xf32>, vector<8x32xf32> -> vector<8x32xf32>
    %15 = vector.broadcast %5 : vector<1x32xf32> to vector<8x32xf32>
    %16 = arith.addf %14, %15 : vector<8x32xf32>
    %cst_20 = arith.constant 0.000000e+00 : f32
    %17 = vector.broadcast %cst_20 : f32 to vector<8x32xf32>
    %18 = arith.maximumf %16, %17 : vector<8x32xf32>
    %cst_21 = arith.constant dense<0.000000e+00> : vector<8x32xf32>
    %19 = tpu.matmul %18, %7, %cst_21 {dimension_numbers = #tpu.dot_dimension_numbers<[1], [0], [0], [1], [0, 0, 1, 1], [], []>} : vector<8x32xf32>, vector<32x32xf32>, vector<8x32xf32> -> vector<8x32xf32>
    %20 = vector.broadcast %9 : vector<1x32xf32> to vector<8x32xf32>
    %21 = arith.addf %19, %20 : vector<8x32xf32>
    %cst_22 = arith.constant 0.000000e+00 : f32
    %22 = vector.broadcast %cst_22 : f32 to vector<8x32xf32>
    %23 = arith.maximumf %21, %22 : vector<8x32xf32>
    %cst_23 = arith.constant dense<0.000000e+00> : vector<8x128xf32>
    %24 = tpu.matmul %23, %11, %cst_23 {dimension_numbers = #tpu.dot_dimension_numbers<[1], [0], [0], [1], [0, 0, 1, 1], [], []>} : vector<8x32xf32>, vector<32x128xf32>, vector<8x128xf32> -> vector<8x128xf32>
    %25 = vector.broadcast %13 : vector<1x128xf32> to vector<8x128xf32>
    %26 = arith.addf %24, %25 : vector<8x128xf32>
    %27 = tpu.iota {dimensions = array<i32: 0>} : vector<8x128xi32>
    %c2_i32 = arith.constant 2 : i32
    %28 = vector.broadcast %c2_i32 : i32 to vector<8x128xi32>
    %29 = arith.cmpi slt, %27, %28 : vector<8x128xi32>
    %cst_24 = arith.constant 0.000000e+00 : f32
    %30 = vector.broadcast %cst_24 : f32 to vector<8x128xf32>
    %31 = arith.select %29, %26, %30 : vector<8x128xi1>, vector<8x128xf32>
    %32 = arith.mulf %31, %31 : vector<8x128xf32>
    %33 = vector.shape_cast %32 : vector<8x128xf32> to vector<1x8x128xf32>
    %cst_25 = arith.constant dense<0.000000e+00> : vector<1xf32>
    %34 = vector.multi_reduction <add>, %33, %cst_25 [1, 2] : vector<1x8x128xf32> to vector<1xf32>
    %35 = vector.shape_cast %34 : vector<1xf32> to vector<1x1x1xf32>
    %36 = vector.extract %35[0, 0, 0] : f32 from vector<1x1x1xf32>
    %cst_26 = arith.constant 0.000000e+00 : f32
    %37 = arith.cmpf ogt, %36, %cst_26 : f32
    %cst_27 = arith.constant 1.000000e+00 : f32
    %38 = arith.select %37, %36, %cst_27 : f32
    %39 = math.rsqrt %38 : f32
    %40 = arith.mulf %36, %39 : f32
    %cst_28 = arith.constant 0.000000e+00 : f32
    %41 = arith.cmpf ogt, %36, %cst_28 : f32
    %42 = math.tanh %40 : f32
    %cst_29 = arith.constant 1.000000e+01 : f32
    %43 = arith.mulf %cst_29, %42 : f32
    %44 = arith.mulf %43, %39 : f32
    %cst_30 = arith.constant 1.000000e+01 : f32
    %45 = arith.select %41, %44, %cst_30 : f32
    %46 = vector.broadcast %45 : f32 to vector<8x128xf32>
    %47 = arith.mulf %46, %31 : vector<8x128xf32>
    %c0_31 = arith.constant 0 : index
    %c0_32 = arith.constant 0 : index
    %c0_33 = arith.constant 0 : index
    %48 = vector.load %arg7[%c0_31, %c0_32, %c0_33] : memref<1x8x128xf32, #tpu.memory_space<vmem>>, vector<1x8x128xf32>
    %49 = vector.shape_cast %48 : vector<1x8x128xf32> to vector<8x128xf32>
    %50 = vector.shape_cast %47 : vector<8x128xf32> to vector<1x8x128xf32>
    tpu.vector_store %arg7[%c0_31, %c0_32, %c0_33], %50 {strides = array<i32>} : memref<1x8x128xf32, #tpu.memory_space<vmem>>, vector<1x8x128xf32>,
    return
  }
}

</mosaic_0001>

<llo_original>
// kernel: tpu_custom_call.1
$region0: #{tpu_custom_call.1}
  #allocation0 [shape = 'u32[]', space=smem, size = 0x4, offset = 0x4, fixed_abs, tag = 'smem constant byte address 0x4 - core index']
  #allocation1 [shape = 'u32[144,128]{1,0:T(1,128)}', space=vmem, size = 0x12000, scoped, tag = 'internal scratch']
  %s0 = inlined_call_operand.hbm [shape: f32[1,8,16], index: 0, kind: input, shape index: {}]
  %s1 = inlined_call_operand.hbm [shape: f32[1,16,32], index: 1, kind: input, shape index: {}]
  %s2 = inlined_call_operand.vmem [shape: f32[1,1,32], index: 2, kind: input, shape index: {}]
  %s3 = inlined_call_operand.hbm [shape: f32[1,32,32], index: 3, kind: input, shape index: {}]
  %s4 = inlined_call_operand.vmem [shape: f32[1,1,32], index: 4, kind: input, shape index: {}]
  %s5 = inlined_call_operand.hbm [shape: f32[1,32,128], index: 5, kind: input, shape index: {}]
  %s6 = inlined_call_operand.vmem [shape: f32[1,1,128], index: 6, kind: input, shape index: {}]
  %s7 = inlined_call_operand.hbm [shape: f32[1,8,128], index: 7, kind: output, shape index: {}]
  %s8 = sld [smem:[#allocation0]]
  $region54: #{tpu_custom_call.1} parent=0
    _
  %s10 = ssub.s32 1, %s8
  %s11 = scalar_select 0, %s10, %s8
  $region1: #{tpu_custom_call.1} parent=0
    #allocation2 [shape = 'u8[4096]{0}', space=vmem, size = 0x1000, scoped, tag = 'input window, operand 0, single buffered']
    #allocation3 [shape = 's32[1]{0}', space=sflag, size = 0x4, scoped, tag = 'scoped memory for tpu_custom_call.1']
    #allocation4 [shape = 's32[1]{0}', space=sflag, size = 0x4, scoped, tag = 'scoped memory for tpu_custom_call.1']
    #allocation5 [shape = 'u8[8192]{0}', space=vmem, size = 0x2000, scoped, tag = 'input window, operand 1, single buffered']
    #allocation6 [shape = 's32[1]{0}', space=sflag, size = 0x4, scoped, tag = 'scoped memory for tpu_custom_call.1']
    #allocation7 [shape = 'u8[16384]{0}', space=vmem, size = 0x4000, scoped, tag = 'input window, operand 3, single buffered']
    #allocation8 [shape = 'u8[16384]{0}', space=vmem, size = 0x4000, scoped, tag = 'input window, operand 5, single buffered']
    #allocation9 [shape = 's32[1]{0}', space=sflag, size = 0x4, scoped, tag = 'scoped memory for tpu_custom_call.1']
    #allocation10 [shape = 'u8[4096]{0}', space=vmem, size = 0x1000, scoped, tag = 'output window, operand 0, single buffered']
    %12 = vsyncpa [#allocation3], 0
    %13 = vsyncpa [#allocation6], 0
    %14 = vsyncpa [#allocation9], 0
    %15 = vsyncpa [#allocation4], 0
    // Predicated region
    $region2: #{tpu_custom_call.1} parent=1 // pred_check
      _
    $region3: #{tpu_custom_call.1} parent=1 // pred_check_branch
      %17 = sbr.rel (0) target = $region5
    $region4: #{tpu_custom_call.1} parent=1 // pred_region
      %s19 = ssub.s32 128, 128
      %20 = vsyncadd [#allocation3], %s19
      %s22 = sshll.u32 [#allocation2], 4
      %s23 = int_to_ptr.vmem [resolvable:$true] %s22
      %25 = dma.hbm_to_vmem [thread:$0]  %s0, 128, %s23, [#allocation3]
    $region5: #{tpu_custom_call.1} parent=1 // pred_fallthru
      _
    // Predicated region
    $region6: #{tpu_custom_call.1} parent=1 // pred_check
      _
    $region7: #{tpu_custom_call.1} parent=1 // pred_check_branch
      %27 = sbr.rel (0) target = $region9
    $region8: #{tpu_custom_call.1} parent=1 // pred_region
      %s29 = ssub.s32 256, 256
      %30 = vsyncadd [#allocation6], %s29
      %s31 = sshll.u32 [#allocation5], 4
      %s32 = int_to_ptr.vmem [resolvable:$true] %s31
      %37 = dma.hbm_to_vmem [thread:$0]  %s1, 256, %s32, [#allocation6], 128, 128, 8
    $region9: #{tpu_custom_call.1} parent=1 // pred_fallthru
      _
    // Predicated region
    $region10: #{tpu_custom_call.1} parent=1 // pred_check
      _
    $region11: #{tpu_custom_call.1} parent=1 // pred_check_branch
      %39 = sbr.rel (0) target = $region13
    $region12: #{tpu_custom_call.1} parent=1 // pred_region
      _
    $region13: #{tpu_custom_call.1} parent=1 // pred_fallthru
      _
    // Predicated region
    $region14: #{tpu_custom_call.1} parent=1 // pred_check
      _
    $region15: #{tpu_custom_call.1} parent=1 // pred_check_branch
      %41 = sbr.rel (0) target = $region17
    $region16: #{tpu_custom_call.1} parent=1 // pred_region
      %s43 = ssub.s32 512, 512
      %44 = vsyncadd [#allocation6], %s43
      %s45 = sshll.u32 [#allocation7], 4
      %s46 = int_to_ptr.vmem [resolvable:$true] %s45
      %51 = dma.hbm_to_vmem [thread:$0]  %s3, 512, %s46, [#allocation6], 128, 128, 8
    $region17: #{tpu_custom_call.1} parent=1 // pred_fallthru
      _
    // Predicated region
    $region18: #{tpu_custom_call.1} parent=1 // pred_check
      _
    $region19: #{tpu_custom_call.1} parent=1 // pred_check_branch
      %53 = sbr.rel (0) target = $region21
    $region20: #{tpu_custom_call.1} parent=1 // pred_region
      _
    $region21: #{tpu_custom_call.1} parent=1 // pred_fallthru
      _
    // Predicated region
    $region22: #{tpu_custom_call.1} parent=1 // pred_check
      _
    $region23: #{tpu_custom_call.1} parent=1 // pred_check_branch
      %55 = sbr.rel (0) target = $region25
    $region24: #{tpu_custom_call.1} parent=1 // pred_region
      %s57 = ssub.s32 512, 512
      %58 = vsyncadd [#allocation9], %s57
      %s59 = sshll.u32 [#allocation8], 4
      %s60 = int_to_ptr.vmem [resolvable:$true] %s59
      %65 = dma.hbm_to_vmem [thread:$0]  %s5, 512, %s60, [#allocation9], 128, 128, 8
    $region25: #{tpu_custom_call.1} parent=1 // pred_fallthru
      _
    // Predicated region
    $region26: #{tpu_custom_call.1} parent=1 // pred_check
      _
    $region27: #{tpu_custom_call.1} parent=1 // pred_check_branch
      %67 = sbr.rel (0) target = $region29
    $region28: #{tpu_custom_call.1} parent=1 // pred_region
      _
    $region29: #{tpu_custom_call.1} parent=1 // pred_fallthru
      _
    // Predicated region
    $region30: #{tpu_custom_call.1} parent=1 // pred_check
      _
    $region31: #{tpu_custom_call.1} parent=1 // pred_check_branch
      %69 = sbr.rel (0) target = $region33
    $region32: #{tpu_custom_call.1} parent=1 // pred_region
      %70 = dma.done [#allocation3], 128
    $region33: #{tpu_custom_call.1} parent=1 // pred_fallthru
      _
    // Predicated region
    $region34: #{tpu_custom_call.1} parent=1 // pred_check
      _
    $region35: #{tpu_custom_call.1} parent=1 // pred_check_branch
      %72 = sbr.rel (0) target = $region37
    $region36: #{tpu_custom_call.1} parent=1 // pred_region
      %73 = dma.done [#allocation6], 256
    $region37: #{tpu_custom_call.1} parent=1 // pred_fallthru
      _
    // Predicated region
    $region38: #{tpu_custom_call.1} parent=1 // pred_check
      _
    $region39: #{tpu_custom_call.1} parent=1 // pred_check_branch
      %75 = sbr.rel (0) target = $region41
    $region40: #{tpu_custom_call.1} parent=1 // pred_region
      %76 = dma.done [#allocation6], 512
    $region41: #{tpu_custom_call.1} parent=1 // pred_fallthru
      _
    // Predicated region
    $region42: #{tpu_custom_call.1} parent=1 // pred_check
      _
    $region43: #{tpu_custom_call.1} parent=1 // pred_check_branch
      %78 = sbr.rel (0) target = $region45
    $region44: #{tpu_custom_call.1} parent=1 // pred_region
      %79 = dma.done [#allocation9], 512
    $region45: #{tpu_custom_call.1} parent=1 // pred_fallthru
      _
    %v80 = vld [vmem:[#allocation2] sm:$0xff]
    %v81 = vld [vmem:[#allocation5] sm:$0xff]
    %v82 = vld [vmem:[#allocation5 + $0x8] sm:$0xff]
    %v83 = vld [vmem:[%s2] sm:$0x1]
    %v84 = vld [vmem:[#allocation7] sm:$0xff]
    %v85 = vld [vmem:[#allocation7 + $0x8] sm:$0xff]
    %v86 = vld [vmem:[#allocation7 + $0x10] sm:$0xff]
    %v87 = vld [vmem:[#allocation7 + $0x18] sm:$0xff]
    %v88 = vld [vmem:[%s4] sm:$0x1]
    %v89 = vld [vmem:[#allocation8] sm:$0xff]
    %v90 = vld [vmem:[#allocation8 + $0x8] sm:$0xff]
    %v91 = vld [vmem:[#allocation8 + $0x10] sm:$0xff]
    %v92 = vld [vmem:[#allocation8 + $0x18] sm:$0xff]
    %v93 = vld [vmem:[%s6] sm:$0x1]
    %v95 = vlaneseq
    %v96 = vshrl.u32 %v95, 7
    %v97 = vsub.s32 0, %v96
    %v98 = vrot.slane %v83, %v97
    %vm100 = vcmask 130048
    %v102 = vsel %vm100, %v80, 0
    %104 = vmatprep.subr.mxu0 0.0
    %105 = vmatpush1.msra.mxu0 0.0
    %106 = vmatprep.subr.mxu0 0.0
    %107 = vmatpush1.msra.mxu0 0.0
    %108 = vmatprep.subr.mxu0 0.0
    %109 = vmatpush1.msra.mxu0 0.0
    %110 = vmatprep.subr.mxu0 0.0
    %111 = vmatpush1.msra.mxu0 0.0
    %112 = vmatprep.subr.mxu0 0.0
    %113 = vmatpush1.msra.mxu0 0.0
    %114 = vmatprep.subr.mxu0 0.0
    %115 = vmatpush1.msra.mxu0 0.0
    %116 = vmatprep.subr.mxu0 0.0
    %117 = vmatpush1.msra.mxu0 0.0
    %118 = vmatprep.subr.mxu0 0.0
    %119 = vmatpush1.msra.mxu0 0.0
    %120 = vmatprep.subr.mxu0 0.0
    %121 = vmatpush1.msra.mxu0 0.0
    %122 = vmatprep.subr.mxu0 0.0
    %123 = vmatpush1.msra.mxu0 0.0
    %124 = vmatprep.subr.mxu0 0.0
    %125 = vmatpush1.msra.mxu0 0.0
    %126 = vmatprep.subr.mxu0 0.0
    %127 = vmatpush1.msra.mxu0 0.0
    %128 = vmatprep.subr.mxu0 0.0
    %129 = vmatpush1.msra.mxu0 0.0
    %130 = vmatprep.subr.mxu0 0.0
    %131 = vmatpush1.msra.mxu0 0.0
    %132 = vmatprep.subr.mxu0 0.0
    %133 = vmatpush1.msra.mxu0 %v82
    %134 = vmatprep.subr.mxu0 0.0
    %135 = vmatpush1.msra.mxu0 %v81
    %136 = vmatprep.subr.mxu0 0.0
    %137 = vmatpush2.msra.mxu0 0.0
    %138 = vmatprep.subr.mxu0 0.0
    %139 = vmatpush2.msra.mxu0 0.0
    %140 = vmatprep.subr.mxu0 0.0
    %141 = vmatpush2.msra.mxu0 0.0
    %142 = vmatprep.subr.mxu0 0.0
    %143 = vmatpush2.msra.mxu0 0.0
    %144 = vmatprep.subr.mxu0 0.0
    %145 = vmatpush2.msra.mxu0 0.0
    %146 = vmatprep.subr.mxu0 0.0
    %147 = vmatpush2.msra.mxu0 0.0
    %148 = vmatprep.subr.mxu0 0.0
    %149 = vmatpush2.msra.mxu0 0.0
    %150 = vmatprep.subr.mxu0 0.0
    %151 = vmatpush2.msra.mxu0 0.0
    %152 = vmatprep.subr.mxu0 0.0
    %153 = vmatpush2.msra.mxu0 0.0
    %154 = vmatprep.subr.mxu0 0.0
    %155 = vmatpush2.msra.mxu0 0.0
    %156 = vmatprep.subr.mxu0 0.0
    %157 = vmatpush2.msra.mxu0 0.0
    %158 = vmatprep.subr.mxu0 0.0
    %159 = vmatpush2.msra.mxu0 0.0
    %160 = vmatprep.subr.mxu0 0.0
    %161 = vmatpush2.msra.mxu0 0.0
    %162 = vmatprep.subr.mxu0 0.0
    %163 = vmatpush2.msra.mxu0 0.0
    %164 = vmatprep.subr.mxu0 0.0
    %165 = vmatpush2.msra.mxu0 0.0
    %166 = vmatprep.subr.mxu0 0.0
    %167 = vmatpush2.msra.mxu0 0.0
    %168 = vmatprep.mubr.f32.mxu0 0.0
    %169 = vmatmul.mubr.f32.gmra.mxu0 %v102
    %v170 = vpop.f32.mrf.mxu0
    %v171 = vadd.f32 %v98, %v170
    %v172 = vpop.f32.mrf.mxu0
    %173 = vdwg.mxu0
    %v174 = vmax.f32 %v171, 0.0
    %v176 = vlaneseq
    %v177 = vshrl.u32 %v176, 7
    %v178 = vsub.s32 0, %v177
    %v179 = vrot.slane %v88, %v178
    %vm181 = vcmask 261120
    %v183 = vsel %vm181, %v174, 0
    %185 = vmatprep.subr.mxu0 0.0
    %186 = vmatpush1.msra.mxu0 0.0
    %187 = vmatprep.subr.mxu0 0.0
    %188 = vmatpush1.msra.mxu0 0.0
    %189 = vmatprep.subr.mxu0 0.0
    %190 = vmatpush1.msra.mxu0 0.0
    %191 = vmatprep.subr.mxu0 0.0
    %192 = vmatpush1.msra.mxu0 0.0
    %193 = vmatprep.subr.mxu0 0.0
    %194 = vmatpush1.msra.mxu0 0.0
    %195 = vmatprep.subr.mxu0 0.0
    %196 = vmatpush1.msra.mxu0 0.0
    %197 = vmatprep.subr.mxu0 0.0
    %198 = vmatpush1.msra.mxu0 0.0
    %199 = vmatprep.subr.mxu0 0.0
    %200 = vmatpush1.msra.mxu0 0.0
    %201 = vmatprep.subr.mxu0 0.0
    %202 = vmatpush1.msra.mxu0 0.0
    %203 = vmatprep.subr.mxu0 0.0
    %204 = vmatpush1.msra.mxu0 0.0
    %205 = vmatprep.subr.mxu0 0.0
    %206 = vmatpush1.msra.mxu0 0.0
    %207 = vmatprep.subr.mxu0 0.0
    %208 = vmatpush1.msra.mxu0 0.0
    %209 = vmatprep.subr.mxu0 0.0
    %210 = vmatpush1.msra.mxu0 %v87
    %211 = vmatprep.subr.mxu0 0.0
    %212 = vmatpush1.msra.mxu0 %v86
    %213 = vmatprep.subr.mxu0 0.0
    %214 = vmatpush1.msra.mxu0 %v85
    %215 = vmatprep.subr.mxu0 0.0
    %216 = vmatpush1.msra.mxu0 %v84
    %217 = vmatprep.subr.mxu0 0.0
    %218 = vmatpush2.msra.mxu0 0.0
    %219 = vmatprep.subr.mxu0 0.0
    %220 = vmatpush2.msra.mxu0 0.0
    %221 = vmatprep.subr.mxu0 0.0
    %222 = vmatpush2.msra.mxu0 0.0
    %223 = vmatprep.subr.mxu0 0.0
    %224 = vmatpush2.msra.mxu0 0.0
    %225 = vmatprep.subr.mxu0 0.0
    %226 = vmatpush2.msra.mxu0 0.0
    %227 = vmatprep.subr.mxu0 0.0
    %228 = vmatpush2.msra.mxu0 0.0
    %229 = vmatprep.subr.mxu0 0.0
    %230 = vmatpush2.msra.mxu0 0.0
    %231 = vmatprep.subr.mxu0 0.0
    %232 = vmatpush2.msra.mxu0 0.0
    %233 = vmatprep.subr.mxu0 0.0
    %234 = vmatpush2.msra.mxu0 0.0
    %235 = vmatprep.subr.mxu0 0.0
    %236 = vmatpush2.msra.mxu0 0.0
    %237 = vmatprep.subr.mxu0 0.0
    %238 = vmatpush2.msra.mxu0 0.0
    %239 = vmatprep.subr.mxu0 0.0
    %240 = vmatpush2.msra.mxu0 0.0
    %241 = vmatprep.subr.mxu0 0.0
    %242 = vmatpush2.msra.mxu0 0.0
    %243 = vmatprep.subr.mxu0 0.0
    %244 = vmatpush2.msra.mxu0 0.0
    %245 = vmatprep.subr.mxu0 0.0
    %246 = vmatpush2.msra.mxu0 0.0
    %247 = vmatprep.subr.mxu0 0.0
    %248 = vmatpush2.msra.mxu0 0.0
    %249 = vmatprep.mubr.f32.mxu0 0.0
    %250 = vmatmul.mubr.f32.gmra.mxu0 %v183
    %v251 = vpop.f32.mrf.mxu0
    %v252 = vadd.f32 %v179, %v251
    %v253 = vpop.f32.mrf.mxu0
    %254 = vdwg.mxu0
    %v255 = vmax.f32 %v252, 0.0
    %v257 = vlaneseq
    %v258 = vshrl.u32 %v257, 7
    %v259 = vsub.s32 0, %v258
    %v260 = vrot.slane %v93, %v259
    %v263 = vsel %vm181, %v255, 0
    %265 = vmatprep.subr.mxu0 0.0
    %266 = vmatpush1.msra.mxu0 0.0
    %267 = vmatprep.subr.mxu0 0.0
    %268 = vmatpush1.msra.mxu0 0.0
    %269 = vmatprep.subr.mxu0 0.0
    %270 = vmatpush1.msra.mxu0 0.0
    %271 = vmatprep.subr.mxu0 0.0
    %272 = vmatpush1.msra.mxu0 0.0
    %273 = vmatprep.subr.mxu0 0.0
    %274 = vmatpush1.msra.mxu0 0.0
    %275 = vmatprep.subr.mxu0 0.0
    %276 = vmatpush1.msra.mxu0 0.0
    %277 = vmatprep.subr.mxu0 0.0
    %278 = vmatpush1.msra.mxu0 0.0
    %279 = vmatprep.subr.mxu0 0.0
    %280 = vmatpush1.msra.mxu0 0.0
    %281 = vmatprep.subr.mxu0 0.0
    %282 = vmatpush1.msra.mxu0 0.0
    %283 = vmatprep.subr.mxu0 0.0
    %284 = vmatpush1.msra.mxu0 0.0
    %285 = vmatprep.subr.mxu0 0.0
    %286 = vmatpush1.msra.mxu0 0.0
    %287 = vmatprep.subr.mxu0 0.0
    %288 = vmatpush1.msra.mxu0 0.0
    %289 = vmatprep.subr.mxu0 0.0
    %290 = vmatpush1.msra.mxu0 %v92
    %291 = vmatprep.subr.mxu0 0.0
    %292 = vmatpush1.msra.mxu0 %v91
    %293 = vmatprep.subr.mxu0 0.0
    %294 = vmatpush1.msra.mxu0 %v90
    %295 = vmatprep.subr.mxu0 0.0
    %296 = vmatpush1.msra.mxu0 %v89
    %297 = vmatprep.subr.mxu0 0.0
    %298 = vmatpush2.msra.mxu0 0.0
    %299 = vmatprep.subr.mxu0 0.0
    %300 = vmatpush2.msra.mxu0 0.0
    %301 = vmatprep.subr.mxu0 0.0
    %302 = vmatpush2.msra.mxu0 0.0
    %303 = vmatprep.subr.mxu0 0.0
    %304 = vmatpush2.msra.mxu0 0.0
    %305 = vmatprep.subr.mxu0 0.0
    %306 = vmatpush2.msra.mxu0 0.0
    %307 = vmatprep.subr.mxu0 0.0
    %308 = vmatpush2.msra.mxu0 0.0
    %309 = vmatprep.subr.mxu0 0.0
    %310 = vmatpush2.msra.mxu0 0.0
    %311 = vmatprep.subr.mxu0 0.0
    %312 = vmatpush2.msra.mxu0 0.0
    %313 = vmatprep.subr.mxu0 0.0
    %314 = vmatpush2.msra.mxu0 0.0
    %315 = vmatprep.subr.mxu0 0.0
    %316 = vmatpush2.msra.mxu0 0.0
    %317 = vmatprep.subr.mxu0 0.0
    %318 = vmatpush2.msra.mxu0 0.0
    %319 = vmatprep.subr.mxu0 0.0
    %320 = vmatpush2.msra.mxu0 0.0
    %321 = vmatprep.subr.mxu0 0.0
    %322 = vmatpush2.msra.mxu0 0.0
    %323 = vmatprep.subr.mxu0 0.0
    %324 = vmatpush2.msra.mxu0 0.0
    %325 = vmatprep.subr.mxu0 0.0
    %326 = vmatpush2.msra.mxu0 0.0
    %327 = vmatprep.subr.mxu0 0.0
    %328 = vmatpush2.msra.mxu0 0.0
    %329 = vmatprep.mubr.f32.mxu0 0.0
    %330 = vmatmul.mubr.f32.gmra.mxu0 %v263
    %v331 = vpop.f32.mrf.mxu0
    %v332 = vadd.f32 %v260, %v331
    %v333 = vpop.f32.mrf.mxu0
    %334 = vdwg.mxu0
    %v335 = vlaneseq
    %v336 = vshrl.u32 %v335, 7
    %vm337 = vcmp.lt.s32.totalorder %v336, 2
    %v338 = vsel %vm337, %v332, 0.0
    %v339 = vmul.f32 %v338, %v338
    %340 = vadd.xlane.f32.xlu0 %v339
    %v341 = vpop.xlane.xlu0 %340
    %v342 = vrot.slane %v341, 4
    %v343 = vadd.f32 %v341, %v342
    %v344 = vrot.slane %v343, 2
    %v345 = vadd.f32 %v343, %v344
    %v346 = vrot.slane %v345, 1
    %v347 = vadd.f32 %v345, %v346
    %s348 = vtos %v347
    %p349 = scmp.gt.f32.partialorder %s348, 0.0
    %s350 = scalar_select %p349, %s348, 1.0
    %v351 = vstv %s350
    %v352 = vrsqrt.pop %v351
    %s353 = vtos %v352
    %s354 = smul.f32 %s348, %s353
    %v355 = vstv %s354
    %v356 = vtanh.pop %v355
    %s357 = vtos %v356
    %s358 = smul.f32 %s357, 10.0
    %s359 = smul.f32 %s358, %s353
    %s360 = scalar_select %p349, %s359, 10.0
    %v361 = vstv %s360
    %v362 = vmul.f32 %v361, %v338
    %363 = vst [vmem:[#allocation10] sm:$0xff] %v362
    // Predicated region
    $region46: #{tpu_custom_call.1} parent=1 // pred_check
      _
    $region47: #{tpu_custom_call.1} parent=1 // pred_check_branch
      %365 = sbr.rel (0) target = $region49
    $region48: #{tpu_custom_call.1} parent=1 // pred_region
      %s367 = ssub.s32 128, 128
      %368 = vsyncadd [#allocation4], %s367
      %s370 = sshll.u32 [#allocation10], 4
      %s371 = int_to_ptr.vmem [resolvable:$true] %s370
      %373 = dma.vmem_to_hbm [thread:$0]  %s371, 128, %s7, [#allocation4]
    $region49: #{tpu_custom_call.1} parent=1 // pred_fallthru
      _
    // Predicated region
    $region50: #{tpu_custom_call.1} parent=1 // pred_check
      _
    $region51: #{tpu_custom_call.1} parent=1 // pred_check_branch
      %375 = sbr.rel (0) target = $region53
    $region52: #{tpu_custom_call.1} parent=1 // pred_region
      %376 = dma.done [#allocation4], 128
    $region53: #{tpu_custom_call.1} parent=1 // pred_fallthru
      _
    %377 = vsyncpa [#allocation3], 1
    %378 = vsyncpa [#allocation6], 1
    %379 = vsyncpa [#allocation9], 1
    %380 = vsyncpa [#allocation4], 1

</llo_original>
